<compile_context>
chip_gen: v6e
topology: v6e:2x2x1
jax: 0.10.0
libtpu: 0.0.40
codegen_flags: <defaults>
</compile_context>

<pallas_src>
import jax
import jax.numpy as jnp
from jax.experimental import pallas as pl
from jax.experimental.pallas import tpu as pltpu


def twolayer_kernel(x_ref, w1_ref, b1_ref, w2_ref, b2_ref, o_ref):
    # x_ref:  (bm, input_dim)      bf16 batch tile
    # w1_ref: (input_dim, hidden)  bf16, resident
    # b1_ref: (1, hidden)          f32
    # w2_ref: (hidden, 2)          f32
    # b2_ref: (1, 2)               f32
    # o_ref:  (bm, 128)            f32 lane-dense padded output block

    # Layer 1: Linear (bf16 operands on the MXU, f32 accumulation) + bias + ReLU.
    h = jnp.dot(x_ref[...], w1_ref[...], preferred_element_type=jnp.float32)
    h = jnp.maximum(h + b1_ref[...], 0.0)

    # TODO(synk): nn.Dropout is identity in eval mode; training-mode random masking
    # (pltpu.prng_seed + pltpu.prng_random_bits with 1/(1-p) scaling) not implemented.

    # Layer 2: Linear -> logits of shape (bm, 2).
    logits = jnp.dot(h, w2_ref[...], preferred_element_type=jnp.float32) + b2_ref[...]

    # 2-class softmax == sigmoid of the logit difference (no cross-lane max/sum needed):
    #   p1 = sigmoid(l1 - l0), p0 = 1 - p1.
    d = logits[:, 1:2] - logits[:, 0:1]                    # (bm, 1)
    p1 = pl.reciprocal(1.0 + jnp.exp(-d), approx=False)    # exact recip keeps tight tolerance
    p1 = jnp.broadcast_to(p1, o_ref.shape)                 # (bm, 128)

    # Lane-dense store: col 0 = p0, col 1 = p1, cols 2..127 = 0. Wrapper slices [:, :2].
    lane = jax.lax.broadcasted_iota(jnp.int32, o_ref.shape, dimension=1)
    o_ref[...] = jnp.where(lane == 1, p1, jnp.where(lane == 0, 1.0 - p1, 0.0))


def twolayer_net(x, w1, b1, w2, b2, *, bm=None):
    batch, input_dim = x.shape
    hidden = w1.shape[1]
    n_cls = w2.shape[1]
    assert n_cls == 2

    # One big tile for small batches (single grid step); cap at 512 rows so that at scale
    # the grid has multiple "parallel" steps and can shard across v7x's two TensorCores.
    if bm is None:
        bm = batch if batch <= 512 else 512
    assert batch % bm == 0
    grid = (batch // bm,)

    PAD_N = 128  # lane-dense output width

    # Stream activations/first-layer weights as bf16 (MXU-native, f32 accumulate).
    x_bf = x.astype(jnp.bfloat16)
    w1_bf = w1.astype(jnp.bfloat16)

    padded = pl.pallas_call(
        twolayer_kernel,
        out_shape=jax.ShapeDtypeStruct((batch, PAD_N), jnp.float32),
        grid_spec=pltpu.PrefetchScalarGridSpec(
            num_scalar_prefetch=0,
            grid=grid,
            in_specs=[
                pl.BlockSpec((bm, input_dim), lambda i: (i, 0)),      # batch tile of x
                pl.BlockSpec((input_dim, hidden), lambda i: (0, 0)),  # full W1 (invariant)
                pl.BlockSpec((1, hidden), lambda i: (0, 0)),          # full b1
                pl.BlockSpec((hidden, n_cls), lambda i: (0, 0)),      # full W2
                pl.BlockSpec((1, n_cls), lambda i: (0, 0)),           # full b2
            ],
            out_specs=pl.BlockSpec((bm, PAD_N), lambda i: (i, 0)),    # lane-dense padded out
        ),
        compiler_params=pltpu.CompilerParams(
            dimension_semantics=("parallel",),
        ),
    )(x_bf, w1_bf, b1, w2, b2)

    return padded[:, :n_cls]


if __name__ == "__main__":
    # Small shapes consistent with the module: args.input_dim=32, args.hidden_dim=32, 2 classes.
    batch, input_dim, hidden_dim, n_cls = 128, 32, 32, 2

    key = jax.random.PRNGKey(0)
    kx, kw1, kw2 = jax.random.split(key, 3)

    # Deterministic parameter init mirroring nn.init.normal_(w, 0, 0.01) and zero biases.
    x = jax.random.normal(kx, (batch, input_dim), dtype=jnp.float32)
    w1 = 0.01 * jax.random.normal(kw1, (input_dim, hidden_dim), dtype=jnp.float32)
    b1 = jnp.zeros((1, hidden_dim), dtype=jnp.float32)
    w2 = 0.01 * jax.random.normal(kw2, (hidden_dim, n_cls), dtype=jnp.float32)
    b2 = jnp.zeros((1, n_cls), dtype=jnp.float32)

    out = twolayer_net(x, w1, b1, w2, b2)
    out = jax.block_until_ready(out)

    # Strict reference: same bf16 rounding of x/W1 that the kernel streams, f32 math.
    xr = x.astype(jnp.bfloat16).astype(jnp.float32)
    w1r = w1.astype(jnp.bfloat16).astype(jnp.float32)
    h_bf = jnp.maximum(xr @ w1r + b1, 0.0)
    ref_bf = jax.nn.softmax(h_bf @ w2 + b2, axis=1)

    # Loose reference: full-f32 eval-mode forward of the PyTorch module.
    h_f32 = jnp.maximum(x @ w1 + b1, 0.0)
    ref_f32 = jax.nn.softmax(h_f32 @ w2 + b2, axis=1)

    assert out.shape == (batch, n_cls)
    assert jnp.allclose(out, ref_bf, atol=2e-5, rtol=2e-5)
    assert jnp.allclose(out, ref_f32, atol=1e-3)
    assert jnp.allclose(jnp.sum(out, axis=1), 1.0, atol=1e-5)

    print("KERNEL_OK")
</pallas_src>

<mosaic_0001>
module attributes {stable_mosaic.version = 11 : i64} {
  func.func @twolayer_kernel(%arg0: i32, %arg1: memref<128x32xbf16, #tpu.memory_space<vmem>>, %arg2: memref<32x32xbf16, #tpu.memory_space<vmem>>, %arg3: memref<1x32xf32, #tpu.memory_space<vmem>>, %arg4: memref<32x2xf32, #tpu.memory_space<vmem>>, %arg5: memref<1x2xf32, #tpu.memory_space<vmem>>, %arg6: memref<128x128xf32, #tpu.memory_space<vmem>>) attributes {dimension_semantics = [#tpu.dimension_semantics<parallel>], iteration_bounds = array<i64: 1>, scalar_prefetch = 0 : i64, scratch_operands = 0 : i64, tpu.core_type = #tpu.core_type<tc>, window_params = [{transform_indices = @transform_0, window_bounds = array<i64: 128, 32>}, {pipeline_mode = #tpu.pipeline_mode<synchronous>, transform_indices = @transform_1, window_bounds = array<i64: 32, 32>}, {pipeline_mode = #tpu.pipeline_mode<synchronous>, transform_indices = @transform_2, window_bounds = array<i64: 1, 32>}, {pipeline_mode = #tpu.pipeline_mode<synchronous>, transform_indices = @transform_3, window_bounds = array<i64: 32, 2>}, {pipeline_mode = #tpu.pipeline_mode<synchronous>, transform_indices = @transform_4, window_bounds = array<i64: 1, 2>}, {transform_indices = @transform_5, window_bounds = array<i64: 128, 128>}]} {
    %c0 = arith.constant 0 : index
    %c0_0 = arith.constant 0 : index
    %0 = vector.load %arg1[%c0, %c0_0] : memref<128x32xbf16, #tpu.memory_space<vmem>>, vector<128x32xbf16>
    %c0_1 = arith.constant 0 : index
    %c0_2 = arith.constant 0 : index
    %1 = vector.load %arg2[%c0_1, %c0_2] : memref<32x32xbf16, #tpu.memory_space<vmem>>, vector<32x32xbf16>
    %cst = arith.constant dense<0.000000e+00> : vector<128x32xf32>
    %2 = tpu.matmul %0, %1, %cst {dimension_numbers = #tpu.dot_dimension_numbers<[1], [0], [0], [1], [0, 0, 1, 1], [], []>} : vector<128x32xbf16>, vector<32x32xbf16>, vector<128x32xf32> -> vector<128x32xf32>
    %c0_3 = arith.constant 0 : index
    %c0_4 = arith.constant 0 : index
    %3 = vector.load %arg3[%c0_3, %c0_4] : memref<1x32xf32, #tpu.memory_space<vmem>>, vector<1x32xf32>
    %4 = vector.broadcast %3 : vector<1x32xf32> to vector<128x32xf32>
    %5 = arith.addf %2, %4 : vector<128x32xf32>
    %cst_5 = arith.constant 0.000000e+00 : f32
    %6 = vector.broadcast %cst_5 : f32 to vector<128x32xf32>
    %7 = arith.maximumf %5, %6 : vector<128x32xf32>
    %c0_6 = arith.constant 0 : index
    %c0_7 = arith.constant 0 : index
    %8 = vector.load %arg4[%c0_6, %c0_7] : memref<32x2xf32, #tpu.memory_space<vmem>>, vector<32x2xf32>
    %cst_8 = arith.constant dense<0.000000e+00> : vector<128x2xf32>
    %9 = tpu.matmul %7, %8, %cst_8 {dimension_numbers = #tpu.dot_dimension_numbers<[1], [0], [0], [1], [0, 0, 1, 1], [], []>} : vector<128x32xf32>, vector<32x2xf32>, vector<128x2xf32> -> vector<128x2xf32>
    %c0_9 = arith.constant 0 : index
    %c0_10 = arith.constant 0 : index
    %10 = vector.load %arg5[%c0_9, %c0_10] : memref<1x2xf32, #tpu.memory_space<vmem>>, vector<1x2xf32>
    %11 = vector.broadcast %10 : vector<1x2xf32> to vector<128x2xf32>
    %12 = arith.addf %9, %11 : vector<128x2xf32>
    %13 = vector.extract_strided_slice %12 {offsets = [0, 1], sizes = [128, 1], strides = [1, 1]} : vector<128x2xf32> to vector<128x1xf32>
    %14 = vector.extract_strided_slice %12 {offsets = [0, 0], sizes = [128, 1], strides = [1, 1]} : vector<128x2xf32> to vector<128x1xf32>
    %15 = arith.subf %13, %14 : vector<128x1xf32>
    %cst_11 = arith.constant 0.000000e+00 : f32
    %16 = vector.broadcast %cst_11 : f32 to vector<128x1xf32>
    %17 = arith.subf %16, %15 : vector<128x1xf32>
    %18 = math.exp %17 : vector<128x1xf32>
    %cst_12 = arith.constant 1.000000e+00 : f32
    %19 = vector.broadcast %cst_12 : f32 to vector<128x1xf32>
    %20 = arith.addf %19, %18 : vector<128x1xf32>
    %21 = tpu.reciprocal %20 : vector<128x1xf32> -> vector<128x1xf32>
    %22 = vector.shape_cast %21 : vector<128x1xf32> to vector<128x1xf32>
    %23 = vector.broadcast %22 : vector<128x1xf32> to vector<128x128xf32>
    %24 = tpu.iota {dimensions = array<i32: 1>} : vector<128x128xi32>
    %c1_i32 = arith.constant 1 : i32
    %25 = vector.broadcast %c1_i32 : i32 to vector<128x128xi32>
    %26 = arith.cmpi eq, %24, %25 : vector<128x128xi32>
    %c0_i32 = arith.constant 0 : i32
    %27 = vector.broadcast %c0_i32 : i32 to vector<128x128xi32>
    %28 = arith.cmpi eq, %24, %27 : vector<128x128xi32>
    %cst_13 = arith.constant 1.000000e+00 : f32
    %29 = vector.broadcast %cst_13 : f32 to vector<128x128xf32>
    %30 = arith.subf %29, %23 : vector<128x128xf32>
    %cst_14 = arith.constant 0.000000e+00 : f32
    %31 = vector.broadcast %cst_14 : f32 to vector<128x128xf32>
    %32 = arith.select %28, %30, %31 : vector<128x128xi1>, vector<128x128xf32>
    %33 = arith.select %26, %23, %32 : vector<128x128xi1>, vector<128x128xf32>
    %c0_15 = arith.constant 0 : index
    %c0_16 = arith.constant 0 : index
    %34 = vector.load %arg6[%c0_15, %c0_16] : memref<128x128xf32, #tpu.memory_space<vmem>>, vector<128x128xf32>
    tpu.vector_store %arg6[%c0_15, %c0_16], %33 {strides = array<i32>} : memref<128x128xf32, #tpu.memory_space<vmem>>, vector<128x128xf32>,
    return
  }
  func.func @transform_0(%arg0: i32) -> (i32, i32) {
    %c0_i32 = arith.constant 0 : i32
    %c0_i32_0 = arith.constant 0 : i32
    return %arg0, %c0_i32 : i32, i32
  }
  func.func @transform_1(%arg0: i32) -> (i32, i32) {
    %c0_i32 = arith.constant 0 : i32
    %c0_i32_0 = arith.constant 0 : i32
    %c0_i32_1 = arith.constant 0 : i32
    return %c0_i32, %c0_i32_0 : i32, i32
  }
  func.func @transform_2(%arg0: i32) -> (i32, i32) {
    %c0_i32 = arith.constant 0 : i32
    %c0_i32_0 = arith.constant 0 : i32
    %c0_i32_1 = arith.constant 0 : i32
    return %c0_i32, %c0_i32_0 : i32, i32
  }
  func.func @transform_3(%arg0: i32) -> (i32, i32) {
    %c0_i32 = arith.constant 0 : i32
    %c0_i32_0 = arith.constant 0 : i32
    %c0_i32_1 = arith.constant 0 : i32
    return %c0_i32, %c0_i32_0 : i32, i32
  }
  func.func @transform_4(%arg0: i32) -> (i32, i32) {
    %c0_i32 = arith.constant 0 : i32
    %c0_i32_0 = arith.constant 0 : i32
    %c0_i32_1 = arith.constant 0 : i32
    return %c0_i32, %c0_i32_0 : i32, i32
  }
  func.func @transform_5(%arg0: i32) -> (i32, i32) {
    %c0_i32 = arith.constant 0 : i32
    %c0_i32_0 = arith.constant 0 : i32
    return %arg0, %c0_i32 : i32, i32
  }
}

</mosaic_0001>

<llo_original>
// kernel: tpu_custom_call.1
$region0: #{tpu_custom_call.1}
  #allocation0 [shape = 'u32[]', space=smem, size = 0x4, offset = 0x4, fixed_abs, tag = 'smem constant byte address 0x4 - core index']
  #allocation1 [shape = 'u32[144,128]{1,0:T(1,128)}', space=vmem, size = 0x12000, scoped, tag = 'internal scratch']
  %s0 = inlined_call_operand.vmem [shape: bf16[128,32], index: 0, kind: input, shape index: {}]
  %s1 = inlined_call_operand.vmem [shape: bf16[32,32], index: 1, kind: input, shape index: {}]
  %s2 = inlined_call_operand.vmem [shape: f32[1,32], index: 2, kind: input, shape index: {}]
  %s3 = inlined_call_operand.vmem [shape: f32[32,2], index: 3, kind: input, shape index: {}]
  %s4 = inlined_call_operand.vmem [shape: f32[1,2], index: 4, kind: input, shape index: {}]
  %s5 = inlined_call_operand.hbm [shape: f32[128,128], index: 5, kind: output, shape index: {}]
  %s6 = sld [smem:[#allocation0]]
  $region30: #{tpu_custom_call.1} parent=0
    _
  %s8 = ssub.s32 1, %s6
  %s9 = scalar_select 0, %s8, %s6
  $region1: #{tpu_custom_call.1} parent=0
    #allocation2 [shape = 'u8[65536]{0}', space=vmem, size = 0x10000, scoped, tag = 'output window, operand 0, single buffered']
    #allocation3 [shape = 's32[1]{0}', space=sflag, size = 0x4, scoped, tag = 'scoped memory for tpu_custom_call.1']
    %10 = vsyncpa [#allocation3], 0
    // Predicated region
    $region2: #{tpu_custom_call.1} parent=1 // pred_check
      _
    $region3: #{tpu_custom_call.1} parent=1 // pred_check_branch
      %12 = sbr.rel (0) target = $region5
    $region4: #{tpu_custom_call.1} parent=1 // pred_region
      _
    $region5: #{tpu_custom_call.1} parent=1 // pred_fallthru
      _
    // Predicated region
    $region6: #{tpu_custom_call.1} parent=1 // pred_check
      _
    $region7: #{tpu_custom_call.1} parent=1 // pred_check_branch
      %14 = sbr.rel (0) target = $region9
    $region8: #{tpu_custom_call.1} parent=1 // pred_region
      _
    $region9: #{tpu_custom_call.1} parent=1 // pred_fallthru
      _
    // Predicated region
    $region10: #{tpu_custom_call.1} parent=1 // pred_check
      _
    $region11: #{tpu_custom_call.1} parent=1 // pred_check_branch
      %16 = sbr.rel (0) target = $region13
    $region12: #{tpu_custom_call.1} parent=1 // pred_region
      _
    $region13: #{tpu_custom_call.1} parent=1 // pred_fallthru
      _
    // Predicated region
    $region14: #{tpu_custom_call.1} parent=1 // pred_check
      _
    $region15: #{tpu_custom_call.1} parent=1 // pred_check_branch
      %18 = sbr.rel (0) target = $region17
    $region16: #{tpu_custom_call.1} parent=1 // pred_region
      _
    $region17: #{tpu_custom_call.1} parent=1 // pred_fallthru
      _
    // Predicated region
    $region18: #{tpu_custom_call.1} parent=1 // pred_check
      _
    $region19: #{tpu_custom_call.1} parent=1 // pred_check_branch
      %20 = sbr.rel (0) target = $region21
    $region20: #{tpu_custom_call.1} parent=1 // pred_region
      _
    $region21: #{tpu_custom_call.1} parent=1 // pred_fallthru
      _
    %v22 = vld [vmem:[%s0] sm:$0xf]
    %v23 = vld [vmem:[%s0 + $0x4] sm:$0xf]
    %v24 = vld [vmem:[%s0 + $0x8] sm:$0xf]
    %v25 = vld [vmem:[%s0 + $0xc] sm:$0xf]
    %v26 = vld [vmem:[%s0 + $0x10] sm:$0xf]
    %v27 = vld [vmem:[%s0 + $0x14] sm:$0xf]
    %v28 = vld [vmem:[%s0 + $0x18] sm:$0xf]
    %v29 = vld [vmem:[%s0 + $0x1c] sm:$0xf]
    %v30 = vld [vmem:[%s0 + $0x20] sm:$0xf]
    %v31 = vld [vmem:[%s0 + $0x24] sm:$0xf]
    %v32 = vld [vmem:[%s0 + $0x28] sm:$0xf]
    %v33 = vld [vmem:[%s0 + $0x2c] sm:$0xf]
    %v34 = vld [vmem:[%s0 + $0x30] sm:$0xf]
    %v35 = vld [vmem:[%s0 + $0x34] sm:$0xf]
    %v36 = vld [vmem:[%s0 + $0x38] sm:$0xf]
    %v37 = vld [vmem:[%s0 + $0x3c] sm:$0xf]
    %v38 = vld [vmem:[%s1] sm:$0xf]
    %v39 = vld [vmem:[%s1 + $0x4] sm:$0xf]
    %v40 = vld [vmem:[%s1 + $0x8] sm:$0xf]
    %v41 = vld [vmem:[%s1 + $0xc] sm:$0xf]
    %v42 = vld [vmem:[%s2] sm:$0x1]
    %v44 = vlaneseq
    %v45 = vshrl.u32 %v44, 7
    %v46 = vsub.s32 0, %v45
    %v47 = vrot.slane %v42, %v46
    %v65 = vunpack.c.l.b16 %v22
    %v66 = vunpack.c.l.b16 %v23
    %v67 = vunpack.c.l.b16 %v24
    %v68 = vunpack.c.l.b16 %v25
    %v69 = vunpack.c.l.b16 %v26
    %v70 = vunpack.c.l.b16 %v27
    %v71 = vunpack.c.l.b16 %v28
    %v72 = vunpack.c.l.b16 %v29
    %v73 = vunpack.c.l.b16 %v30
    %v74 = vunpack.c.l.b16 %v31
    %v75 = vunpack.c.l.b16 %v32
    %v76 = vunpack.c.l.b16 %v33
    %v77 = vunpack.c.l.b16 %v34
    %v78 = vunpack.c.l.b16 %v35
    %v79 = vunpack.c.l.b16 %v36
    %v80 = vunpack.c.l.b16 %v37
    %v81 = vpack.c.b16 %v66, %v65
    %v82 = vpack.c.b16 %v68, %v67
    %v83 = vpack.c.b16 %v70, %v69
    %v84 = vpack.c.b16 %v72, %v71
    %v85 = vpack.c.b16 %v74, %v73
    %v86 = vpack.c.b16 %v76, %v75
    %v87 = vpack.c.b16 %v78, %v77
    %v88 = vpack.c.b16 %v80, %v79
    %v93 = vunpack.c.l.b16 %v38
    %v94 = vunpack.c.l.b16 %v39
    %v95 = vunpack.c.l.b16 %v40
    %v96 = vunpack.c.l.b16 %v41
    %v97 = vpack.c.b16 %v94, %v93
    %v98 = vpack.c.b16 %v96, %v95
    %vm101 = vcmask 261120
    %v103 = vsel %vm101, %v81, 0
    %v106 = vsel %vm101, %v82, 0
    %v109 = vsel %vm101, %v83, 0
    %v112 = vsel %vm101, %v84, 0
    %v115 = vsel %vm101, %v85, 0
    %v118 = vsel %vm101, %v86, 0
    %v121 = vsel %vm101, %v87, 0
    %v124 = vsel %vm101, %v88, 0
    %126 = vmatprep.subr.bf16.mxu0 0
    %127 = vmatpush1.bf16.msra.mxu0 0
    %128 = vmatprep.subr.bf16.mxu0 0
    %129 = vmatpush1.bf16.msra.mxu0 0
    %130 = vmatprep.subr.bf16.mxu0 0
    %131 = vmatpush1.bf16.msra.mxu0 0
    %132 = vmatprep.subr.bf16.mxu0 0
    %133 = vmatpush1.bf16.msra.mxu0 0
    %134 = vmatprep.subr.bf16.mxu0 0
    %135 = vmatpush1.bf16.msra.mxu0 0
    %136 = vmatprep.subr.bf16.mxu0 0
    %137 = vmatpush1.bf16.msra.mxu0 0
    %138 = vmatprep.subr.bf16.mxu0 0
    %139 = vmatpush1.bf16.msra.mxu0 %v98
    %140 = vmatprep.subr.bf16.mxu0 0
    %141 = vmatpush1.bf16.msra.mxu0 %v97
    %142 = vmatprep.subr.bf16.mxu0 0
    %143 = vmatpush2.bf16.msra.mxu0 0
    %144 = vmatprep.subr.bf16.mxu0 0
    %145 = vmatpush2.bf16.msra.mxu0 0
    %146 = vmatprep.subr.bf16.mxu0 0
    %147 = vmatpush2.bf16.msra.mxu0 0
    %148 = vmatprep.subr.bf16.mxu0 0
    %149 = vmatpush2.bf16.msra.mxu0 0
    %150 = vmatprep.subr.bf16.mxu0 0
    %151 = vmatpush2.bf16.msra.mxu0 0
    %152 = vmatprep.subr.bf16.mxu0 0
    %153 = vmatpush2.bf16.msra.mxu0 0
    %154 = vmatprep.subr.bf16.mxu0 0
    %155 = vmatpush2.bf16.msra.mxu0 0
    %156 = vmatprep.subr.bf16.mxu0 0
    %157 = vmatpush2.bf16.msra.mxu0 0
    %158 = vmatprep.mubr.bf16.mxu0 0
    %159 = vmatmul.mubr.bf16.gmra.mxu0 %v103
    %v160 = vpop.f32.mrf.mxu0
    %v161 = vadd.f32 %v47, %v160
    %v162 = vpop.f32.mrf.mxu0
    %v163 = vpop.f32.mrf.mxu0
    %v164 = vadd.f32 %v47, %v163
    %v165 = vpop.f32.mrf.mxu0
    %166 = vmatprep.mubr.bf16.mxu0 0
    %167 = vmatmul.mubr.bf16.gmra.mxu0 %v106
    %v168 = vpop.f32.mrf.mxu0
    %v169 = vadd.f32 %v47, %v168
    %v170 = vpop.f32.mrf.mxu0
    %v171 = vpop.f32.mrf.mxu0
    %v172 = vadd.f32 %v47, %v171
    %v173 = vpop.f32.mrf.mxu0
    %174 = vmatprep.mubr.bf16.mxu0 0
    %175 = vmatmul.mubr.bf16.gmra.mxu0 %v109
    %v176 = vpop.f32.mrf.mxu0
    %v177 = vadd.f32 %v47, %v176
    %v178 = vpop.f32.mrf.mxu0
    %v179 = vpop.f32.mrf.mxu0
    %v180 = vadd.f32 %v47, %v179
    %v181 = vpop.f32.mrf.mxu0
    %182 = vmatprep.mubr.bf16.mxu0 0
    %183 = vmatmul.mubr.bf16.gmra.mxu0 %v112
    %v184 = vpop.f32.mrf.mxu0
    %v185 = vadd.f32 %v47, %v184
    %v186 = vpop.f32.mrf.mxu0
    %v187 = vpop.f32.mrf.mxu0
    %v188 = vadd.f32 %v47, %v187
    %v189 = vpop.f32.mrf.mxu0
    %190 = vmatprep.mubr.bf16.mxu0 0
    %191 = vmatmul.mubr.bf16.gmra.mxu0 %v115
    %v192 = vpop.f32.mrf.mxu0
    %v193 = vadd.f32 %v47, %v192
    %v194 = vpop.f32.mrf.mxu0
    %v195 = vpop.f32.mrf.mxu0
    %v196 = vadd.f32 %v47, %v195
    %v197 = vpop.f32.mrf.mxu0
    %198 = vmatprep.mubr.bf16.mxu0 0
    %199 = vmatmul.mubr.bf16.gmra.mxu0 %v118
    %v200 = vpop.f32.mrf.mxu0
    %v201 = vadd.f32 %v47, %v200
    %v202 = vpop.f32.mrf.mxu0
    %v203 = vpop.f32.mrf.mxu0
    %v204 = vadd.f32 %v47, %v203
    %v205 = vpop.f32.mrf.mxu0
    %206 = vmatprep.mubr.bf16.mxu0 0
    %207 = vmatmul.mubr.bf16.gmra.mxu0 %v121
    %v208 = vpop.f32.mrf.mxu0
    %v209 = vadd.f32 %v47, %v208
    %v210 = vpop.f32.mrf.mxu0
    %v211 = vpop.f32.mrf.mxu0
    %v212 = vadd.f32 %v47, %v211
    %v213 = vpop.f32.mrf.mxu0
    %214 = vmatprep.mubr.bf16.mxu0 0
    %215 = vmatmul.mubr.bf16.gmra.mxu0 %v124
    %v216 = vpop.f32.mrf.mxu0
    %v217 = vadd.f32 %v47, %v216
    %v218 = vpop.f32.mrf.mxu0
    %v219 = vpop.f32.mrf.mxu0
    %v220 = vadd.f32 %v47, %v219
    %v221 = vpop.f32.mrf.mxu0
    %222 = vdwg.mxu0
    %v223 = vmax.f32 %v161, 0.0
    %v224 = vmax.f32 %v164, 0.0
    %v225 = vmax.f32 %v169, 0.0
    %v226 = vmax.f32 %v172, 0.0
    %v227 = vmax.f32 %v177, 0.0
    %v228 = vmax.f32 %v180, 0.0
    %v229 = vmax.f32 %v185, 0.0
    %v230 = vmax.f32 %v188, 0.0
    %v231 = vmax.f32 %v193, 0.0
    %v232 = vmax.f32 %v196, 0.0
    %v233 = vmax.f32 %v201, 0.0
    %v234 = vmax.f32 %v204, 0.0
    %v235 = vmax.f32 %v209, 0.0
    %v236 = vmax.f32 %v212, 0.0
    %v237 = vmax.f32 %v217, 0.0
    %v238 = vmax.f32 %v220, 0.0
    %v239 = vld [vmem:[%s3] sm:$0xff]
    %v240 = vld [vmem:[%s3 + $0x8] sm:$0xff]
    %v241 = vld [vmem:[%s3 + $0x10] sm:$0xff]
    %v242 = vld [vmem:[%s3 + $0x18] sm:$0xff]
    %v243 = vld [vmem:[%s4] sm:$0x1]
    %v245 = vlaneseq
    %v246 = vshrl.u32 %v245, 7
    %v247 = vsub.s32 0, %v246
    %v248 = vrot.slane %v243, %v247
    %v251 = vsel %vm101, %v223, 0
    %v254 = vsel %vm101, %v224, 0
    %v257 = vsel %vm101, %v225, 0
    %v260 = vsel %vm101, %v226, 0
    %v263 = vsel %vm101, %v227, 0
    %v266 = vsel %vm101, %v228, 0
    %v269 = vsel %vm101, %v229, 0
    %v272 = vsel %vm101, %v230, 0
    %v275 = vsel %vm101, %v231, 0
    %v278 = vsel %vm101, %v232, 0
    %v281 = vsel %vm101, %v233, 0
    %v284 = vsel %vm101, %v234, 0
    %v287 = vsel %vm101, %v235, 0
    %v290 = vsel %vm101, %v236, 0
    %v293 = vsel %vm101, %v237, 0
    %v296 = vsel %vm101, %v238, 0
    %298 = vmatprep.subr.mxu0 0.0
    %299 = vmatpush1.msra.mxu0 0.0
    %300 = vmatprep.subr.mxu0 0.0
    %301 = vmatpush1.msra.mxu0 0.0
    %302 = vmatprep.subr.mxu0 0.0
    %303 = vmatpush1.msra.mxu0 0.0
    %304 = vmatprep.subr.mxu0 0.0
    %305 = vmatpush1.msra.mxu0 0.0
    %306 = vmatprep.subr.mxu0 0.0
    %307 = vmatpush1.msra.mxu0 0.0
    %308 = vmatprep.subr.mxu0 0.0
    %309 = vmatpush1.msra.mxu0 0.0
    %310 = vmatprep.subr.mxu0 0.0
    %311 = vmatpush1.msra.mxu0 0.0
    %312 = vmatprep.subr.mxu0 0.0
    %313 = vmatpush1.msra.mxu0 0.0
    %314 = vmatprep.subr.mxu0 0.0
    %315 = vmatpush1.msra.mxu0 0.0
    %316 = vmatprep.subr.mxu0 0.0
    %317 = vmatpush1.msra.mxu0 0.0
    %318 = vmatprep.subr.mxu0 0.0
    %319 = vmatpush1.msra.mxu0 0.0
    %320 = vmatprep.subr.mxu0 0.0
    %321 = vmatpush1.msra.mxu0 0.0
    %322 = vmatprep.subr.mxu0 0.0
    %323 = vmatpush1.msra.mxu0 %v242
    %324 = vmatprep.subr.mxu0 0.0
    %325 = vmatpush1.msra.mxu0 %v241
    %326 = vmatprep.subr.mxu0 0.0
    %327 = vmatpush1.msra.mxu0 %v240
    %328 = vmatprep.subr.mxu0 0.0
    %329 = vmatpush1.msra.mxu0 %v239
    %330 = vmatprep.subr.mxu0 0.0
    %331 = vmatpush2.msra.mxu0 0.0
    %332 = vmatprep.subr.mxu0 0.0
    %333 = vmatpush2.msra.mxu0 0.0
    %334 = vmatprep.subr.mxu0 0.0
    %335 = vmatpush2.msra.mxu0 0.0
    %336 = vmatprep.subr.mxu0 0.0
    %337 = vmatpush2.msra.mxu0 0.0
    %338 = vmatprep.subr.mxu0 0.0
    %339 = vmatpush2.msra.mxu0 0.0
    %340 = vmatprep.subr.mxu0 0.0
    %341 = vmatpush2.msra.mxu0 0.0
    %342 = vmatprep.subr.mxu0 0.0
    %343 = vmatpush2.msra.mxu0 0.0
    %344 = vmatprep.subr.mxu0 0.0
    %345 = vmatpush2.msra.mxu0 0.0
    %346 = vmatprep.subr.mxu0 0.0
    %347 = vmatpush2.msra.mxu0 0.0
    %348 = vmatprep.subr.mxu0 0.0
    %349 = vmatpush2.msra.mxu0 0.0
    %350 = vmatprep.subr.mxu0 0.0
    %351 = vmatpush2.msra.mxu0 0.0
    %352 = vmatprep.subr.mxu0 0.0
    %353 = vmatpush2.msra.mxu0 0.0
    %354 = vmatprep.subr.mxu0 0.0
    %355 = vmatpush2.msra.mxu0 0.0
    %356 = vmatprep.subr.mxu0 0.0
    %357 = vmatpush2.msra.mxu0 0.0
    %358 = vmatprep.subr.mxu0 0.0
    %359 = vmatpush2.msra.mxu0 0.0
    %360 = vmatprep.subr.mxu0 0.0
    %361 = vmatpush2.msra.mxu0 0.0
    %362 = vmatprep.mubr.f32.mxu0 0.0
    %363 = vmatmul.mubr.f32.gmra.mxu0 %v251
    %v364 = vpop.f32.mrf.mxu0
    %v365 = vadd.f32 %v248, %v364
    %v366 = vpop.f32.mrf.mxu0
    %367 = vmatprep.mubr.f32.mxu0 0.0
    %368 = vmatmul.mubr.f32.gmra.mxu0 %v254
    %v369 = vpop.f32.mrf.mxu0
    %v370 = vadd.f32 %v248, %v369
    %v371 = vpop.f32.mrf.mxu0
    %372 = vmatprep.mubr.f32.mxu0 0.0
    %373 = vmatmul.mubr.f32.gmra.mxu0 %v257
    %v374 = vpop.f32.mrf.mxu0
    %v375 = vadd.f32 %v248, %v374
    %v376 = vpop.f32.mrf.mxu0
    %377 = vmatprep.mubr.f32.mxu0 0.0
    %378 = vmatmul.mubr.f32.gmra.mxu0 %v260
    %v379 = vpop.f32.mrf.mxu0
    %v380 = vadd.f32 %v248, %v379
    %v381 = vpop.f32.mrf.mxu0
    %382 = vmatprep.mubr.f32.mxu0 0.0
    %383 = vmatmul.mubr.f32.gmra.mxu0 %v263
    %v384 = vpop.f32.mrf.mxu0
    %v385 = vadd.f32 %v248, %v384
    %v386 = vpop.f32.mrf.mxu0
    %387 = vmatprep.mubr.f32.mxu0 0.0
    %388 = vmatmul.mubr.f32.gmra.mxu0 %v266
    %v389 = vpop.f32.mrf.mxu0
    %v390 = vadd.f32 %v248, %v389
    %v391 = vpop.f32.mrf.mxu0
    %392 = vmatprep.mubr.f32.mxu0 0.0
    %393 = vmatmul.mubr.f32.gmra.mxu0 %v269
    %v394 = vpop.f32.mrf.mxu0
    %v395 = vadd.f32 %v248, %v394
    %v396 = vpop.f32.mrf.mxu0
    %397 = vmatprep.mubr.f32.mxu0 0.0
    %398 = vmatmul.mubr.f32.gmra.mxu0 %v272
    %v399 = vpop.f32.mrf.mxu0
    %v400 = vadd.f32 %v248, %v399
    %v401 = vpop.f32.mrf.mxu0
    %402 = vmatprep.mubr.f32.mxu0 0.0
    %403 = vmatmul.mubr.f32.gmra.mxu0 %v275
    %v404 = vpop.f32.mrf.mxu0
    %v405 = vadd.f32 %v248, %v404
    %v406 = vpop.f32.mrf.mxu0
    %407 = vmatprep.mubr.f32.mxu0 0.0
    %408 = vmatmul.mubr.f32.gmra.mxu0 %v278
    %v409 = vpop.f32.mrf.mxu0
    %v410 = vadd.f32 %v248, %v409
    %v411 = vpop.f32.mrf.mxu0
    %412 = vmatprep.mubr.f32.mxu0 0.0
    %413 = vmatmul.mubr.f32.gmra.mxu0 %v281
    %v414 = vpop.f32.mrf.mxu0
    %v415 = vadd.f32 %v248, %v414
    %v416 = vpop.f32.mrf.mxu0
    %417 = vmatprep.mubr.f32.mxu0 0.0
    %418 = vmatmul.mubr.f32.gmra.mxu0 %v284
    %v419 = vpop.f32.mrf.mxu0
    %v420 = vadd.f32 %v248, %v419
    %v421 = vpop.f32.mrf.mxu0
    %422 = vmatprep.mubr.f32.mxu0 0.0
    %423 = vmatmul.mubr.f32.gmra.mxu0 %v287
    %v424 = vpop.f32.mrf.mxu0
    %v425 = vadd.f32 %v248, %v424
    %v426 = vpop.f32.mrf.mxu0
    %427 = vmatprep.mubr.f32.mxu0 0.0
    %428 = vmatmul.mubr.f32.gmra.mxu0 %v290
    %v429 = vpop.f32.mrf.mxu0
    %v430 = vadd.f32 %v248, %v429
    %v431 = vpop.f32.mrf.mxu0
    %432 = vmatprep.mubr.f32.mxu0 0.0
    %433 = vmatmul.mubr.f32.gmra.mxu0 %v293
    %v434 = vpop.f32.mrf.mxu0
    %v435 = vadd.f32 %v248, %v434
    %v436 = vpop.f32.mrf.mxu0
    %437 = vmatprep.mubr.f32.mxu0 0.0
    %438 = vmatmul.mubr.f32.gmra.mxu0 %v296
    %v439 = vpop.f32.mrf.mxu0
    %v440 = vadd.f32 %v248, %v439
    %v441 = vpop.f32.mrf.mxu0
    %442 = vdwg.mxu0
    %459 = vrot.lane.b32.xlu0 %v365, 1
    %v460 = vpop.permute.xlu0 %459
    %461 = vrot.lane.b32.xlu0 %v370, 1
    %v462 = vpop.permute.xlu0 %461
    %463 = vrot.lane.b32.xlu0 %v375, 1
    %v464 = vpop.permute.xlu0 %463
    %465 = vrot.lane.b32.xlu0 %v380, 1
    %v466 = vpop.permute.xlu0 %465
    %467 = vrot.lane.b32.xlu0 %v385, 1
    %v468 = vpop.permute.xlu0 %467
    %469 = vrot.lane.b32.xlu0 %v390, 1
    %v470 = vpop.permute.xlu0 %469
    %471 = vrot.lane.b32.xlu0 %v395, 1
    %v472 = vpop.permute.xlu0 %471
    %473 = vrot.lane.b32.xlu0 %v400, 1
    %v474 = vpop.permute.xlu0 %473
    %475 = vrot.lane.b32.xlu0 %v405, 1
    %v476 = vpop.permute.xlu0 %475
    %477 = vrot.lane.b32.xlu0 %v410, 1
    %v478 = vpop.permute.xlu0 %477
    %479 = vrot.lane.b32.xlu0 %v415, 1
    %v480 = vpop.permute.xlu0 %479
    %481 = vrot.lane.b32.xlu0 %v420, 1
    %v482 = vpop.permute.xlu0 %481
    %483 = vrot.lane.b32.xlu0 %v425, 1
    %v484 = vpop.permute.xlu0 %483
    %485 = vrot.lane.b32.xlu0 %v430, 1
    %v486 = vpop.permute.xlu0 %485
    %487 = vrot.lane.b32.xlu0 %v435, 1
    %v488 = vpop.permute.xlu0 %487
    %489 = vrot.lane.b32.xlu0 %v440, 1
    %v490 = vpop.permute.xlu0 %489
    %v507 = vsub.f32 %v365, %v460
    %v508 = vsub.f32 %v370, %v462
    %v509 = vsub.f32 %v375, %v464
    %v510 = vsub.f32 %v380, %v466
    %v511 = vsub.f32 %v385, %v468
    %v512 = vsub.f32 %v390, %v470
    %v513 = vsub.f32 %v395, %v472
    %v514 = vsub.f32 %v400, %v474
    %v515 = vsub.f32 %v405, %v476
    %v516 = vsub.f32 %v410, %v478
    %v517 = vsub.f32 %v415, %v480
    %v518 = vsub.f32 %v420, %v482
    %v519 = vsub.f32 %v425, %v484
    %v520 = vsub.f32 %v430, %v486
    %v521 = vsub.f32 %v435, %v488
    %v522 = vsub.f32 %v440, %v490
    %v523 = vsub.f32 0.0, %v507
    %v524 = vsub.f32 0.0, %v508
    %v525 = vsub.f32 0.0, %v509
    %v526 = vsub.f32 0.0, %v510
    %v527 = vsub.f32 0.0, %v511
    %v528 = vsub.f32 0.0, %v512
    %v529 = vsub.f32 0.0, %v513
    %v530 = vsub.f32 0.0, %v514
    %v531 = vsub.f32 0.0, %v515
    %v532 = vsub.f32 0.0, %v516
    %v533 = vsub.f32 0.0, %v517
    %v534 = vsub.f32 0.0, %v518
    %v535 = vsub.f32 0.0, %v519
    %v536 = vsub.f32 0.0, %v520
    %v537 = vsub.f32 0.0, %v521
    %v538 = vsub.f32 0.0, %v522
    %v539 = vmul.f32 %v523, 1.442695
    %v540 = vpow.pop %v539
    %v541 = vmul.f32 %v524, 1.442695
    %v542 = vpow.pop %v541
    %v543 = vmul.f32 %v525, 1.442695
    %v544 = vpow.pop %v543
    %v545 = vmul.f32 %v526, 1.442695
    %v546 = vpow.pop %v545
    %v547 = vmul.f32 %v527, 1.442695
    %v548 = vpow.pop %v547
    %v549 = vmul.f32 %v528, 1.442695
    %v550 = vpow.pop %v549
    %v551 = vmul.f32 %v529, 1.442695
    %v552 = vpow.pop %v551
    %v553 = vmul.f32 %v530, 1.442695
    %v554 = vpow.pop %v553
    %v555 = vmul.f32 %v531, 1.442695
    %v556 = vpow.pop %v555
    %v557 = vmul.f32 %v532, 1.442695
    %v558 = vpow.pop %v557
    %v559 = vmul.f32 %v533, 1.442695
    %v560 = vpow.pop %v559
    %v561 = vmul.f32 %v534, 1.442695
    %v562 = vpow.pop %v561
    %v563 = vmul.f32 %v535, 1.442695
    %v564 = vpow.pop %v563
    %v565 = vmul.f32 %v536, 1.442695
    %v566 = vpow.pop %v565
    %v567 = vmul.f32 %v537, 1.442695
    %v568 = vpow.pop %v567
    %v569 = vmul.f32 %v538, 1.442695
    %v570 = vpow.pop %v569
    %v571 = vadd.f32 %v540, 1.0
    %v572 = vadd.f32 %v542, 1.0
    %v573 = vadd.f32 %v544, 1.0
    %v574 = vadd.f32 %v546, 1.0
    %v575 = vadd.f32 %v548, 1.0
    %v576 = vadd.f32 %v550, 1.0
    %v577 = vadd.f32 %v552, 1.0
    %v578 = vadd.f32 %v554, 1.0
    %v579 = vadd.f32 %v556, 1.0
    %v580 = vadd.f32 %v558, 1.0
    %v581 = vadd.f32 %v560, 1.0
    %v582 = vadd.f32 %v562, 1.0
    %v583 = vadd.f32 %v564, 1.0
    %v584 = vadd.f32 %v566, 1.0
    %v585 = vadd.f32 %v568, 1.0
    %v586 = vadd.f32 %v570, 1.0
    %v587 = vrcp.pop %v571
    %v588 = vrcp.pop %v572
    %v589 = vrcp.pop %v573
    %v590 = vrcp.pop %v574
    %v591 = vrcp.pop %v575
    %v592 = vrcp.pop %v576
    %v593 = vrcp.pop %v577
    %v594 = vrcp.pop %v578
    %v595 = vrcp.pop %v579
    %v596 = vrcp.pop %v580
    %v597 = vrcp.pop %v581
    %v598 = vrcp.pop %v582
    %v599 = vrcp.pop %v583
    %v600 = vrcp.pop %v584
    %v601 = vrcp.pop %v585
    %v602 = vrcp.pop %v586
    %604 = vset.pattern.permute.xlu0 1
    %605 = vperm.xlu0 %604, %v587
    %v606 = vpop.permute.xlu0 %605
    %609 = vset.pattern.permute.xlu0 1
    %610 = vperm.xlu0 %609, %v588
    %v611 = vpop.permute.xlu0 %610
    %614 = vset.pattern.permute.xlu0 1
    %615 = vperm.xlu0 %614, %v589
    %v616 = vpop.permute.xlu0 %615
    %619 = vset.pattern.permute.xlu0 1
    %620 = vperm.xlu0 %619, %v590
    %v621 = vpop.permute.xlu0 %620
    %624 = vset.pattern.permute.xlu0 1
    %625 = vperm.xlu0 %624, %v591
    %v626 = vpop.permute.xlu0 %625
    %629 = vset.pattern.permute.xlu0 1
    %630 = vperm.xlu0 %629, %v592
    %v631 = vpop.permute.xlu0 %630
    %634 = vset.pattern.permute.xlu0 1
    %635 = vperm.xlu0 %634, %v593
    %v636 = vpop.permute.xlu0 %635
    %639 = vset.pattern.permute.xlu0 1
    %640 = vperm.xlu0 %639, %v594
    %v641 = vpop.permute.xlu0 %640
    %644 = vset.pattern.permute.xlu0 1
    %645 = vperm.xlu0 %644, %v595
    %v646 = vpop.permute.xlu0 %645
    %649 = vset.pattern.permute.xlu0 1
    %650 = vperm.xlu0 %649, %v596
    %v651 = vpop.permute.xlu0 %650
    %654 = vset.pattern.permute.xlu0 1
    %655 = vperm.xlu0 %654, %v597
    %v656 = vpop.permute.xlu0 %655
    %659 = vset.pattern.permute.xlu0 1
    %660 = vperm.xlu0 %659, %v598
    %v661 = vpop.permute.xlu0 %660
    %664 = vset.pattern.permute.xlu0 1
    %665 = vperm.xlu0 %664, %v599
    %v666 = vpop.permute.xlu0 %665
    %669 = vset.pattern.permute.xlu0 1
    %670 = vperm.xlu0 %669, %v600
    %v671 = vpop.permute.xlu0 %670
    %674 = vset.pattern.permute.xlu0 1
    %675 = vperm.xlu0 %674, %v601
    %v676 = vpop.permute.xlu0 %675
    %679 = vset.pattern.permute.xlu0 1
    %680 = vperm.xlu0 %679, %v602
    %v681 = vpop.permute.xlu0 %680
    %v683 = vlaneseq
    %v684 = vand.u32 %v683, 127
    %vm685 = vcmp.eq.s32.totalorder %v684, 1
    %vm686 = vcmp.eq.s32.totalorder %v684, 0
    %v687 = vsub.f32 1.0, %v606
    %v688 = vsub.f32 1.0, %v611
    %v689 = vsub.f32 1.0, %v616
    %v690 = vsub.f32 1.0, %v621
    %v691 = vsub.f32 1.0, %v626
    %v692 = vsub.f32 1.0, %v631
    %v693 = vsub.f32 1.0, %v636
    %v694 = vsub.f32 1.0, %v641
    %v695 = vsub.f32 1.0, %v646
    %v696 = vsub.f32 1.0, %v651
    %v697 = vsub.f32 1.0, %v656
    %v698 = vsub.f32 1.0, %v661
    %v699 = vsub.f32 1.0, %v666
    %v700 = vsub.f32 1.0, %v671
    %v701 = vsub.f32 1.0, %v676
    %v702 = vsub.f32 1.0, %v681
    %v703 = vsel %vm686, %v687, 0.0
    %v704 = vsel %vm686, %v688, 0.0
    %v705 = vsel %vm686, %v689, 0.0
    %v706 = vsel %vm686, %v690, 0.0
    %v707 = vsel %vm686, %v691, 0.0
    %v708 = vsel %vm686, %v692, 0.0
    %v709 = vsel %vm686, %v693, 0.0
    %v710 = vsel %vm686, %v694, 0.0
    %v711 = vsel %vm686, %v695, 0.0
    %v712 = vsel %vm686, %v696, 0.0
    %v713 = vsel %vm686, %v697, 0.0
    %v714 = vsel %vm686, %v698, 0.0
    %v715 = vsel %vm686, %v699, 0.0
    %v716 = vsel %vm686, %v700, 0.0
    %v717 = vsel %vm686, %v701, 0.0
    %v718 = vsel %vm686, %v702, 0.0
    %v719 = vsel %vm685, %v606, %v703
    %v720 = vsel %vm685, %v611, %v704
    %v721 = vsel %vm685, %v616, %v705
    %v722 = vsel %vm685, %v621, %v706
    %v723 = vsel %vm685, %v626, %v707
    %v724 = vsel %vm685, %v631, %v708
    %v725 = vsel %vm685, %v636, %v709
    %v726 = vsel %vm685, %v641, %v710
    %v727 = vsel %vm685, %v646, %v711
    %v728 = vsel %vm685, %v651, %v712
    %v729 = vsel %vm685, %v656, %v713
    %v730 = vsel %vm685, %v661, %v714
    %v731 = vsel %vm685, %v666, %v715
    %v732 = vsel %vm685, %v671, %v716
    %v733 = vsel %vm685, %v676, %v717
    %v734 = vsel %vm685, %v681, %v718
    %735 = vst [vmem:[#allocation2] sm:$0xff] %v719
    %736 = vst [vmem:[#allocation2 + $0x8] sm:$0xff] %v720
    %737 = vst [vmem:[#allocation2 + $0x10] sm:$0xff] %v721
    %738 = vst [vmem:[#allocation2 + $0x18] sm:$0xff] %v722
    %739 = vst [vmem:[#allocation2 + $0x20] sm:$0xff] %v723
    %740 = vst [vmem:[#allocation2 + $0x28] sm:$0xff] %v724
    %741 = vst [vmem:[#allocation2 + $0x30] sm:$0xff] %v725
    %742 = vst [vmem:[#allocation2 + $0x38] sm:$0xff] %v726
    %743 = vst [vmem:[#allocation2 + $0x40] sm:$0xff] %v727
    %744 = vst [vmem:[#allocation2 + $0x48] sm:$0xff] %v728
    %745 = vst [vmem:[#allocation2 + $0x50] sm:$0xff] %v729
    %746 = vst [vmem:[#allocation2 + $0x58] sm:$0xff] %v730
    %747 = vst [vmem:[#allocation2 + $0x60] sm:$0xff] %v731
    %748 = vst [vmem:[#allocation2 + $0x68] sm:$0xff] %v732
    %749 = vst [vmem:[#allocation2 + $0x70] sm:$0xff] %v733
    %750 = vst [vmem:[#allocation2 + $0x78] sm:$0xff] %v734
    // Predicated region
    $region22: #{tpu_custom_call.1} parent=1 // pred_check
      _
    $region23: #{tpu_custom_call.1} parent=1 // pred_check_branch
      %752 = sbr.rel (0) target = $region25
    $region24: #{tpu_custom_call.1} parent=1 // pred_region
      %s754 = ssub.s32 2048, 2048
      %755 = vsyncadd [#allocation3], %s754
      %s756 = sshll.u32 [#allocation2], 4
      %s757 = int_to_ptr.vmem [resolvable:$true] %s756
      %762 = dma.vmem_to_hbm [thread:$0]  %s757, 2048, %s5, [#allocation3], 128, 128, 8
    $region25: #{tpu_custom_call.1} parent=1 // pred_fallthru
      _
    // Predicated region
    $region26: #{tpu_custom_call.1} parent=1 // pred_check
      _
    $region27: #{tpu_custom_call.1} parent=1 // pred_check_branch
      %764 = sbr.rel (0) target = $region29
    $region28: #{tpu_custom_call.1} parent=1 // pred_region
      %765 = dma.done [#allocation3], 2048
    $region29: #{tpu_custom_call.1} parent=1 // pred_fallthru
      _
    %766 = vsyncpa [#allocation3], 1

</llo_original>
